<compile_context>
chip_gen: v7x
topology: tpu7x:2x2x1
jax: 0.10.0
libtpu: 0.0.40
codegen_flags: <defaults>
</compile_context>

<pallas_src>
import jax
import jax.numpy as jnp
from jax.experimental import pallas as pl
from jax.experimental.pallas import tpu as pltpu


def _broadcast_add_kernel(add_ref, mem_ref, out_ref):
    # add_ref: VMEM (T_R, 1)     -- per-row additive value (row = one (b, c) pair)
    # mem_ref: VMEM (T_R, T_HW)  -- one tile of the flattened memory encoding
    # out_ref: VMEM (T_R, T_HW)
    # Single fused read -> add -> write; broadcast over the lane (HW) axis.
    out_ref[...] = mem_ref[...] + add_ref[...]


def _round_down(x: int, m: int) -> int:
    return (x // m) * m


def _generation_params():
    """Per-generation (block byte budget, #TensorCores sharing 'parallel' axes)."""
    budget, n_cores = 2 * 1024 * 1024, 1  # safe default: fits v5e's 16 MiB scoped VMEM
    try:
        kind = jax.devices()[0].device_kind.lower()
    except Exception:
        return budget, n_cores
    if "v7" in kind:
        # v7x: ~3.2 TB/s HBM wants bigger steps, but only 64 MiB physical VMEM
        # (32 MiB scoped default) and 2 TensorCores sharding "parallel" axes.
        return 6 * 1024 * 1024, 2
    if "v6" in kind:
        return 4 * 1024 * 1024, 1
    return budget, n_cores  # v5e / unknown: stay conservative


def _select_tiles(n_rows: int, hw: int, elem_bytes: int, budget: int, n_cores: int):
    """Byte-budgeted (T_R, T_HW).

    T_R is a multiple of 8 (or the full row extent); T_HW is a multiple of 128
    (or the full HW extent). Partial trailing blocks are masked by Pallas.
    """
    total_bytes = n_rows * hw * elem_bytes
    # Keep >= 2 grid steps per TensorCore when the tensor is big enough that
    # doing so still leaves a meaningful (>= 512 KiB) block.
    par_cap = max(total_bytes // (2 * n_cores), 512 * 1024)
    budget = min(budget, par_cap)

    # Row (sublane) tile: full extent when modest, else a large multiple of 8.
    t_r = n_rows if n_rows <= 1024 else max(min(_round_down(n_rows, 8), 1024), 8)

    # Lane tile: sized so t_r * t_hw * elem_bytes ~= budget.
    if hw <= 128:
        t_hw = hw  # full extent (always legal)
    else:
        target = max(budget // (t_r * elem_bytes), 128)
        t_hw = max(_round_down(target, 128), 128)
        if hw % 128 == 0:
            t_hw = min(t_hw, hw)
        elif t_hw >= hw:
            t_hw = hw  # full extent fits the budget -> always legal
        else:
            # 128-multiple lane tile; the remainder block is masked by Pallas.
            t_hw = min(t_hw, _round_down(hw, 128))
    return t_r, t_hw


def no_object_encoder_v2p1(memory_encoding, object_score, no_object_embed,
                           *, donate_memory_encoding=False):
    """
    memory_encoding: (B, C, H, W)
    object_score:    (B, 1)
    no_object_embed: (1, C)
    returns:         (B, C, H, W), same dtype as memory_encoding
    """
    B, C, H, W = memory_encoding.shape
    HW = H * W
    R = B * C
    dtype = memory_encoding.dtype
    elem_bytes = jnp.dtype(dtype).itemsize

    # Hoisted (tiny) XLA work: per-(batch, channel) additive value, row-major
    # flattened to match mem_flat's rows, pre-cast to the encoding dtype so the
    # kernel is a single clean vadd with matching store dtype.
    flag = (object_score < 0.0).astype(no_object_embed.dtype)       # (B, 1)
    add = (flag * no_object_embed).astype(dtype).reshape(R, 1)      # (B*C, 1)

    mem_flat = memory_encoding.reshape(R, HW)

    budget, n_cores = _generation_params()
    t_r, t_hw = _select_tiles(R, HW, elem_bytes, budget, n_cores)
    grid = (pl.cdiv(R, t_r), pl.cdiv(HW, t_hw))

    call_kwargs = {}
    if donate_memory_encoding:
        # Alias the (flattened) memory encoding to the output to halve the HBM
        # footprint when the caller donates the input buffer.
        call_kwargs["input_output_aliases"] = {1: 0}

    out_flat = pl.pallas_call(
        _broadcast_add_kernel,
        out_shape=jax.ShapeDtypeStruct((R, HW), dtype),
        grid=grid,
        in_specs=[
            # Per-row additive value; same lane-0 column block for every HW step.
            pl.BlockSpec((t_r, 1), lambda r, h: (r, 0)),
            # Sublane- and lane-dense memory-encoding tile.
            pl.BlockSpec((t_r, t_hw), lambda r, h: (r, h)),
        ],
        out_specs=pl.BlockSpec((t_r, t_hw), lambda r, h: (r, h)),
        compiler_params=pltpu.CompilerParams(
            dimension_semantics=("parallel", "parallel"),
        ),
        **call_kwargs,
    )(add, mem_flat)

    return out_flat.reshape(B, C, H, W)


if __name__ == "__main__":
    # Small shapes consistent with the module's forward:
    #   memory_encoding: B x C x H x W, object_score: B x 1, embed: 1 x C
    B, C, H, W = 2, 4, 16, 16

    key = jax.random.PRNGKey(0)
    k_mem, k_score, k_embed = jax.random.split(key, 3)

    memory_encoding = jax.random.normal(k_mem, (B, C, H, W), dtype=jnp.float32)
    # Exercise both branches (one score < 0, one >= 0).
    object_score = jnp.array([[-1.5], [2.0]], dtype=jnp.float32) + \
        0.0 * jax.random.normal(k_score, (B, 1), dtype=jnp.float32)
    # Deterministic synthetic "learned" parameter (not a checkpoint).
    no_object_embed = jax.random.normal(k_embed, (1, C), dtype=jnp.float32)

    out = no_object_encoder_v2p1(memory_encoding, object_score, no_object_embed)
    out = jax.block_until_ready(out)

    # Pure-JAX reference.
    flag = (object_score < 0.0).astype(no_object_embed.dtype)        # (B, 1)
    ref = memory_encoding + (flag * no_object_embed)[:, :, None, None]

    assert out.shape == memory_encoding.shape
    assert out.dtype == memory_encoding.dtype
    assert jnp.allclose(out, ref, atol=1e-6, rtol=1e-6)

    print("KERNEL_OK")
</pallas_src>

<mosaic_0001>
module attributes {stable_mosaic.version = 11 : i64} {
  func.func @_broadcast_add_kernel(%arg0: i32, %arg1: i32, %arg2: memref<8x1xf32, #tpu.memory_space<vmem>>, %arg3: memref<8x256xf32, #tpu.memory_space<vmem>>, %arg4: memref<8x256xf32, #tpu.memory_space<vmem>>) attributes {dimension_semantics = [#tpu.dimension_semantics<parallel>, #tpu.dimension_semantics<parallel>], iteration_bounds = array<i64: 1, 1>, scalar_prefetch = 0 : i64, scratch_operands = 0 : i64, tpu.core_type = #tpu.core_type<tc>, window_params = [{transform_indices = @transform_0, window_bounds = array<i64: 8, 1>}, {transform_indices = @transform_1, window_bounds = array<i64: 8, 256>}, {transform_indices = @transform_2, window_bounds = array<i64: 8, 256>}]} {
    %c0 = arith.constant 0 : index
    %c0_0 = arith.constant 0 : index
    %0 = vector.load %arg3[%c0, %c0_0] : memref<8x256xf32, #tpu.memory_space<vmem>>, vector<8x256xf32>
    %c0_1 = arith.constant 0 : index
    %c0_2 = arith.constant 0 : index
    %1 = vector.load %arg2[%c0_1, %c0_2] : memref<8x1xf32, #tpu.memory_space<vmem>>, vector<8x1xf32>
    %2 = vector.broadcast %1 : vector<8x1xf32> to vector<8x256xf32>
    %3 = arith.addf %0, %2 : vector<8x256xf32>
    %c0_3 = arith.constant 0 : index
    %c0_4 = arith.constant 0 : index
    %4 = vector.load %arg4[%c0_3, %c0_4] : memref<8x256xf32, #tpu.memory_space<vmem>>, vector<8x256xf32>
    tpu.vector_store %arg4[%c0_3, %c0_4], %3 {strides = array<i32>} : memref<8x256xf32, #tpu.memory_space<vmem>>, vector<8x256xf32>,
    return
  }
  func.func @transform_0(%arg0: i32, %arg1: i32) -> (i32, i32) {
    %c0_i32 = arith.constant 0 : i32
    %c0_i32_0 = arith.constant 0 : i32
    return %arg0, %c0_i32 : i32, i32
  }
  func.func @transform_1(%arg0: i32, %arg1: i32) -> (i32, i32) {
    %c0_i32 = arith.constant 0 : i32
    return %arg0, %arg1 : i32, i32
  }
  func.func @transform_2(%arg0: i32, %arg1: i32) -> (i32, i32) {
    %c0_i32 = arith.constant 0 : i32
    return %arg0, %arg1 : i32, i32
  }
}

</mosaic_0001>

<llo_original>
// kernel: tpu_custom_call.1
$region0: #{tpu_custom_call.1}
  #allocation0 [shape = 'u32[]', space=smem, size = 0x4, offset = 0x4, fixed_abs, tag = 'smem constant byte address 0x4 - core index']
  #allocation1 [shape = 'u32[144,128]{1,0:T(1,128)}', space=vmem, size = 0x12000, scoped, tag = 'internal scratch']
  %s0 = inlined_call_operand.vmem [shape: f32[8,1], index: 0, kind: input, shape index: {}]
  %s1 = inlined_call_operand.hbm [shape: f32[8,256], index: 1, kind: input, shape index: {}]
  %s2 = inlined_call_operand.hbm [shape: f32[8,256], index: 2, kind: output, shape index: {}]
  %s3 = sld [smem:[#allocation0]]
  $region22: #{tpu_custom_call.1} parent=0
    _
  %s5 = ssub.s32 1, %s3
  %s6 = scalar_select 0, %s5, %s3
  $region1: #{tpu_custom_call.1} parent=0
    #allocation2 [shape = 'u8[8192]{0}', space=vmem, size = 0x2000, scoped, tag = 'input window, operand 1, single buffered']
    #allocation3 [shape = 's32[1]{0}', space=sflag, size = 0x4, scoped, tag = 'scoped memory for tpu_custom_call.1']
    #allocation4 [shape = 's32[1]{0}', space=sflag, size = 0x4, scoped, tag = 'scoped memory for tpu_custom_call.1']
    #allocation5 [shape = 'u8[8192]{0}', space=vmem, size = 0x2000, scoped, tag = 'output window, operand 0, single buffered']
    %7 = vsyncpa [#allocation3], 0
    %8 = vsyncpa [#allocation4], 0
    // Predicated region
    $region2: #{tpu_custom_call.1} parent=1 // pred_check
      _
    $region3: #{tpu_custom_call.1} parent=1 // pred_check_branch
      %10 = sbr.rel (0) target = $region5
    $region4: #{tpu_custom_call.1} parent=1 // pred_region
      _
    $region5: #{tpu_custom_call.1} parent=1 // pred_fallthru
      _
    // Predicated region
    $region6: #{tpu_custom_call.1} parent=1 // pred_check
      _
    $region7: #{tpu_custom_call.1} parent=1 // pred_check_branch
      %12 = sbr.rel (0) target = $region9
    $region8: #{tpu_custom_call.1} parent=1 // pred_region
      %s14 = ssub.s32 256, 256
      %15 = vsyncadd [#allocation3], %s14
      %s17 = sshll.u32 [#allocation2], 4
      %s18 = int_to_ptr.vmem [resolvable:$true] %s17
      %20 = dma.hbm_to_vmem [thread:$0]  %s1, 256, %s18, [#allocation3]
    $region9: #{tpu_custom_call.1} parent=1 // pred_fallthru
      _
    // Predicated region
    $region10: #{tpu_custom_call.1} parent=1 // pred_check
      _
    $region11: #{tpu_custom_call.1} parent=1 // pred_check_branch
      %22 = sbr.rel (0) target = $region13
    $region12: #{tpu_custom_call.1} parent=1 // pred_region
      %23 = dma.done [#allocation3], 256
    $region13: #{tpu_custom_call.1} parent=1 // pred_fallthru
      _
    %v24 = vld [vmem:[#allocation2] sm:$0xff]
    %v25 = vld [vmem:[#allocation2 + $0x8] sm:$0xff]
    %v26 = vld [vmem:[%s0] sm:$0xff]
    %28 = vset.pattern.permute.xlu0 0
    %29 = vperm.xlu0 %28, %v26
    %v30 = vpop.permute.xlu0 %29
    %v32 = vadd.f32 %v24, %v30
    %v33 = vadd.f32 %v25, %v30
    %34 = vst [vmem:[#allocation5] sm:$0xff] %v32
    %35 = vst [vmem:[#allocation5 + $0x8] sm:$0xff] %v33
    // Predicated region
    $region14: #{tpu_custom_call.1} parent=1 // pred_check
      _
    $region15: #{tpu_custom_call.1} parent=1 // pred_check_branch
      %37 = sbr.rel (0) target = $region17
    $region16: #{tpu_custom_call.1} parent=1 // pred_region
      %s39 = ssub.s32 256, 256
      %40 = vsyncadd [#allocation4], %s39
      %s42 = sshll.u32 [#allocation5], 4
      %s43 = int_to_ptr.vmem [resolvable:$true] %s42
      %45 = dma.vmem_to_hbm [thread:$0]  %s43, 256, %s2, [#allocation4]
    $region17: #{tpu_custom_call.1} parent=1 // pred_fallthru
      _
    // Predicated region
    $region18: #{tpu_custom_call.1} parent=1 // pred_check
      _
    $region19: #{tpu_custom_call.1} parent=1 // pred_check_branch
      %47 = sbr.rel (0) target = $region21
    $region20: #{tpu_custom_call.1} parent=1 // pred_region
      %48 = dma.done [#allocation4], 256
    $region21: #{tpu_custom_call.1} parent=1 // pred_fallthru
      _
    %49 = vsyncpa [#allocation3], 1
    %50 = vsyncpa [#allocation4], 1

</llo_original>
